<compile_context>
chip_gen: v7x
topology: tpu7x:2x2x1
jax: 0.10.0
libtpu: 0.0.40
codegen_flags: <defaults>
</compile_context>

<pallas_src>
from functools import partial

import jax
import jax.numpy as jnp
from jax.experimental import pallas as pl
from jax.experimental.pallas import tpu as pltpu


_MAX_TILE_BYTES = 8 * 1024 * 1024          # per-tile VMEM target (8 MiB)
_VMEM_LIMIT_BYTES = 48 * 1024 * 1024       # 4 x 8 MiB buffers + headroom (< v7x 64 MiB)
_COL_CANDIDATES = (1024, 512, 256, 128)    # lane-dense slab widths (multiples of 128)


def _choose_slab(total, sublane):
    """Pick (rows, cols) with rows*cols == total (padding-free reshape),
    cols a multiple of 128, rows a multiple of the dtype sublane pack."""
    for cols in _COL_CANDIDATES:
        if total % cols == 0 and (total // cols) % sublane == 0:
            return total // cols, cols
    return None


def _choose_tile_rows(rows, sublane, max_tile_rows):
    """Tile height: multiple of `sublane`, divides `rows`, <= max_tile_rows.
    Prefer an even step count >= 4 (pipeline overlap, v7x 2-core balance)."""
    cap = min(rows, max(sublane, max_tile_rows))
    cap -= cap % sublane
    candidates = [tr for tr in range(cap, 0, -sublane) if rows % tr == 0]
    # candidates are sorted descending (largest tile first).
    for min_steps, want_even in ((4, True), (4, False), (2, True), (1, False)):
        for tr in candidates:
            steps = rows // tr
            if steps >= min_steps and (not want_even or steps % 2 == 0):
                return tr
    return sublane  # unreachable: `sublane` always divides `rows`


def residual_block_kernel(x_ref, o_ref):
    x = x_ref[...]
    # blocks = Identity, shortcut = Identity  ->  out = blocks(x) + residual = 2*x
    # (activation is None in the base class; treated as identity, see TODO above)
    o_ref[...] = x + x


@partial(jax.jit, static_argnums=(1, 2))
def residual_block_forward(x, in_channels, out_channels):
    """Pallas implementation of ResidualBlock.forward for NCHW input.

    The result is 2*x whether or not the shortcut branch is 'applied', since both
    blocks and shortcut are nn.Identity() in this base class; in/out_channels only
    select which Identity is used.
    """
    assert x.shape[1] == in_channels
    orig_shape = x.shape
    total = x.size
    itemsize = jnp.dtype(x.dtype).itemsize
    sublane = max(8, 32 // itemsize)  # 8 f32 / 16 bf16 / 32 int8|fp8 (packed sublanes)

    slab = _choose_slab(total, sublane)
    if slab is None:
        # TODO(synk): no (sublane,128)-tileable padding-free layout for this element
        # count; pad+slice around the kernel would cost ~3x the ideal HBM traffic, so
        # for this degenerate case we let XLA fuse the trivial elementwise op itself.
        return x + x

    rows, cols = slab
    max_tile_rows = max(sublane, _MAX_TILE_BYTES // (cols * itemsize))
    tr = _choose_tile_rows(rows, sublane, max_tile_rows)
    grid = (rows // tr,)

    # Layout plumbing only: contiguous reshape (free) to the lane-dense slab.
    x2 = x.reshape(rows, cols)

    out2 = pl.pallas_call(
        residual_block_kernel,
        out_shape=jax.ShapeDtypeStruct((rows, cols), x2.dtype),
        grid=grid,
        in_specs=[pl.BlockSpec((tr, cols), lambda i: (i, 0))],
        out_specs=pl.BlockSpec((tr, cols), lambda i: (i, 0)),
        cost_estimate=pl.CostEstimate(
            flops=total,
            transcendentals=0,
            bytes_accessed=2 * total * itemsize,
        ),
        compiler_params=pltpu.CompilerParams(
            dimension_semantics=("parallel",),
            vmem_limit_bytes=_VMEM_LIMIT_BYTES,
        ),
    )(x2)

    return out2.reshape(orig_shape)


if __name__ == "__main__":
    key = jax.random.PRNGKey(0)

    # Primary small example (matches the module's NCHW convention).
    N, C, H, W = 2, 4, 16, 16
    x = jax.random.normal(key, (N, C, H, W), dtype=jnp.float32)

    out = jax.block_until_ready(residual_block_forward(x, C, C))
    ref = x + x  # blocks(x) + residual = 2 * x
    assert out.shape == x.shape and out.dtype == x.dtype
    assert jnp.allclose(out, ref, atol=1e-6, rtol=1e-6)

    # Shortcut-branch case (in_channels != out_channels): shortcut is also Identity,
    # so the numerics are identical.
    out_sc = jax.block_until_ready(residual_block_forward(x, C, 2 * C))
    assert jnp.allclose(out_sc, ref, atol=1e-6, rtol=1e-6)

    # Exercise the multi-step (grid > 1), pipelined path with a larger activation:
    # 2,097,152 elements -> slab (2048, 1024), tile (512, 1024), grid (4,).
    xb = jax.random.normal(jax.random.PRNGKey(0), (8, 64, 64, 64), dtype=jnp.float32)
    outb = jax.block_until_ready(residual_block_forward(xb, 64, 64))
    assert outb.shape == xb.shape and outb.dtype == xb.dtype
    assert jnp.allclose(outb, xb + xb, atol=1e-6, rtol=1e-6)

    print("KERNEL_OK")
</pallas_src>

<mosaic_0001>
module attributes {stable_mosaic.version = 11 : i64} {
  func.func @residual_block_kernel(%arg0: i32, %arg1: memref<8x256xf32, #tpu.memory_space<vmem>>, %arg2: memref<8x256xf32, #tpu.memory_space<vmem>>) attributes {dimension_semantics = [#tpu.dimension_semantics<parallel>], iteration_bounds = array<i64: 1>, scalar_prefetch = 0 : i64, scratch_operands = 0 : i64, tpu.core_type = #tpu.core_type<tc>, window_params = [{transform_indices = @transform_0, window_bounds = array<i64: 8, 256>}, {transform_indices = @transform_1, window_bounds = array<i64: 8, 256>}]} {
    %c0 = arith.constant 0 : index
    %c0_0 = arith.constant 0 : index
    %0 = vector.load %arg1[%c0, %c0_0] : memref<8x256xf32, #tpu.memory_space<vmem>>, vector<8x256xf32>
    %1 = arith.addf %0, %0 : vector<8x256xf32>
    %c0_1 = arith.constant 0 : index
    %c0_2 = arith.constant 0 : index
    %2 = vector.load %arg2[%c0_1, %c0_2] : memref<8x256xf32, #tpu.memory_space<vmem>>, vector<8x256xf32>
    tpu.vector_store %arg2[%c0_1, %c0_2], %1 {strides = array<i32>} : memref<8x256xf32, #tpu.memory_space<vmem>>, vector<8x256xf32>,
    return
  }
  func.func @transform_0(%arg0: i32) -> (i32, i32) {
    %c0_i32 = arith.constant 0 : i32
    %c0_i32_0 = arith.constant 0 : i32
    return %arg0, %c0_i32 : i32, i32
  }
  func.func @transform_1(%arg0: i32) -> (i32, i32) {
    %c0_i32 = arith.constant 0 : i32
    %c0_i32_0 = arith.constant 0 : i32
    return %arg0, %c0_i32 : i32, i32
  }
}

</mosaic_0001>

<llo_original>
// kernel: residual_block_forward.1
$region0: #{residual_block_forward.1}
  #allocation0 [shape = 'u32[]', space=smem, size = 0x4, offset = 0x4, fixed_abs, tag = 'smem constant byte address 0x4 - core index']
  #allocation1 [shape = 'u32[144,128]{1,0:T(1,128)}', space=vmem, size = 0x12000, scoped, tag = 'internal scratch']
  %s0 = inlined_call_operand.vmem [shape: f32[8,256], index: 0, kind: input, shape index: {}]
  %s1 = inlined_call_operand.vmem [shape: f32[8,256], index: 1, kind: output, shape index: {}]
  %s2 = sld [smem:[#allocation0]]
  $region14: #{residual_block_forward.1} parent=0
    _
  %s4 = ssub.s32 1, %s2
  %s5 = scalar_select 0, %s4, %s2
  // Predicated region
  $region2: #{residual_block_forward.1} parent=0 // pred_check
    _
  $region3: #{residual_block_forward.1} parent=0 // pred_check_branch
    %7 = sbr.rel (0) target = $region5
  $region4: #{residual_block_forward.1} parent=0 // pred_region
    _
  $region5: #{residual_block_forward.1} parent=0 // pred_fallthru
    _
  %v8 = vld [vmem:[%s0] sm:$0xff]
  %v9 = vld [vmem:[%s0 + $0x8] sm:$0xff]
  %v10 = vadd.f32 %v8, %v8
  %v11 = vadd.f32 %v9, %v9
  %12 = vst [vmem:[%s1] sm:$0xff] %v10
  %13 = vst [vmem:[%s1 + $0x8] sm:$0xff] %v11
  // Predicated region
  $region6: #{residual_block_forward.1} parent=0 // pred_check
    _
  $region7: #{residual_block_forward.1} parent=0 // pred_check_branch
    %15 = sbr.rel (0) target = $region9
  $region8: #{residual_block_forward.1} parent=0 // pred_region
    _
  $region9: #{residual_block_forward.1} parent=0 // pred_fallthru
    _
  // Predicated region
  $region10: #{residual_block_forward.1} parent=0 // pred_check
    _
  $region11: #{residual_block_forward.1} parent=0 // pred_check_branch
    %17 = sbr.rel (0) target = $region13
  $region12: #{residual_block_forward.1} parent=0 // pred_region
    _
  $region13: #{residual_block_forward.1} parent=0 // pred_fallthru
    _

</llo_original>
